<compile_context>
chip_gen: v5e
topology: v5e:2x2
jax: 0.10.0
libtpu: 0.0.40
codegen_flags: <defaults>
</compile_context>

<pallas_src>
import functools

import jax
import jax.numpy as jnp
from jax.experimental import pallas as pl
from jax.experimental.pallas import tpu as pltpu


def _round_up(x, m):
    return ((x + m - 1) // m) * m


def _pick_tile(n, preferred, align):
    """Largest multiple of `align` that divides n and is <= preferred; fallback: n."""
    t = min(preferred, n)
    t -= t % align
    while t >= align:
        if n % t == 0:
            return t
        t -= align
    return n


def _mosaic_params(dim_sem, vmem_est_bytes):
    """Only raise the scoped VMEM limit when the estimate exceeds the 32 MiB default."""
    if vmem_est_bytes > 32 * 1024 * 1024:
        return pltpu.CompilerParams(
            dimension_semantics=dim_sem,
            vmem_limit_bytes=int(min(vmem_est_bytes, 96 * 1024 * 1024)))
    return pltpu.CompilerParams(dimension_semantics=dim_sem)


# ----------------------------------------------------------------------------
# Kernel 1: fused (A [* adj]) @ E  -> graph-propagated embeddings
#   bf16 adjacency / mask / E straight into the MXU, f32 accumulation into the
#   resident output tile; E held fully VMEM-resident (streamed from HBM once).
# ----------------------------------------------------------------------------
def _graph_emb_masked_kernel(tk):
    def kernel(a_ref, adj_ref, e_ref, o_ref):
        k = pl.program_id(1)

        @pl.when(k == 0)
        def _init():
            o_ref[...] = jnp.zeros_like(o_ref)

        # bf16 elementwise mask (bf16 VALU on v6e/v7x; Mosaic widens internally on v5e)
        w = a_ref[...] * adj_ref[...]
        off = pl.multiple_of(k * tk, tk)
        o_ref[...] += jnp.dot(w, e_ref[pl.ds(off, tk), :],
                              preferred_element_type=jnp.float32)
    return kernel


def _graph_emb_plain_kernel(tk):
    def kernel(a_ref, e_ref, o_ref):
        k = pl.program_id(1)

        @pl.when(k == 0)
        def _init():
            o_ref[...] = jnp.zeros_like(o_ref)

        off = pl.multiple_of(k * tk, tk)
        o_ref[...] += jnp.dot(a_ref[...], e_ref[pl.ds(off, tk), :],
                              preferred_element_type=jnp.float32)
    return kernel


def graph_embeddings(aj_norm_l, embeddings, adj_mul=None, *, tm_pref=512, tk_pref=4096):
    """G = (aj_norm_l [* adj_mul]) @ embeddings, tiled over rows AND the contraction axis."""
    N, K = embeddings.shape
    assert aj_norm_l.shape == (N, N)
    assert N % 128 == 0, "pad n_users+n_items to a multiple of 128 at init"

    E = embeddings.astype(jnp.bfloat16)        # bf16 MXU operand, streamed once (resident)
    tm = _pick_tile(N, tm_pref, 16)            # 16-aligned rows: bf16 sublane packing
    tk = _pick_tile(N, tk_pref, 128)           # contraction tile (lane aligned)
    grid = (N // tm, N // tk)

    a_spec = pl.BlockSpec((tm, tk), lambda i, k: (i, k))
    e_spec = pl.BlockSpec((N, K), lambda i, k: (0, 0))      # constant index -> resident E
    o_spec = pl.BlockSpec((tm, K), lambda i, k: (i, 0))     # same block across k -> f32 acc

    a_bytes = aj_norm_l.dtype.itemsize
    if adj_mul is not None:
        assert adj_mul.shape == (N, N)
        kernel = _graph_emb_masked_kernel(tk)
        in_specs = [a_spec, pl.BlockSpec((tm, tk), lambda i, k: (i, k)), e_spec]
        operands = (aj_norm_l, adj_mul, E)
        adj_hbm = N * N * adj_mul.dtype.itemsize
        n_adj_tiles = 2
    else:
        # adj_tag=False path: do NOT stream an NxN ones matrix.
        kernel = _graph_emb_plain_kernel(tk)
        in_specs = [a_spec, e_spec]
        operands = (aj_norm_l, E)
        adj_hbm = 0
        n_adj_tiles = 1

    bytes_accessed = N * N * a_bytes + adj_hbm + N * K * 2 + N * K * 4
    vmem_est = (2 * n_adj_tiles * tm * tk * a_bytes      # double-buffered A (+adj) tiles
                + 2 * N * K * 2                          # resident bf16 E (conservative x2)
                + 2 * tm * K * 4                         # resident f32 output tile
                + (2 << 20))

    return pl.pallas_call(
        kernel,
        out_shape=jax.ShapeDtypeStruct((N, K), jnp.float32),
        grid=grid,
        in_specs=in_specs,
        out_specs=o_spec,
        compiler_params=_mosaic_params(("parallel", "arbitrary"), vmem_est),
        cost_estimate=pl.CostEstimate(flops=2 * N * N * K, transcendentals=0,
                                      bytes_accessed=bytes_accessed),
    )(*operands)


# ----------------------------------------------------------------------------
# Kernel 2: batched prediction head
#   b_blk (user,item) pairs per grid step; in-kernel row gather from VMEM-resident
#   G via scalar-prefetch indices; dense lane-wide (1, b_blk) pred blocks; masked
#   partial squared-sums accumulated into resident (1,1) norm outputs.
# ----------------------------------------------------------------------------
def _make_pred_head_kernel(total_b, b_blk, inv_n_elem):
    def kernel(u_idx_ref, i_idx_ref, g_ref, ge_ref,
               pred_ref, unorm_ref, inorm_ref, u_buf, i_buf):
        blk = pl.program_id(0)
        base = blk * b_blk

        @pl.when(blk == 0)
        def _init():
            unorm_ref[...] = jnp.zeros_like(unorm_ref)
            inorm_ref[...] = jnp.zeros_like(inorm_ref)

        # gather b_blk user rows / item rows of G into VMEM scratch
        def gather_row(r, carry):
            u_buf[pl.ds(r, 1), :] = g_ref[pl.ds(u_idx_ref[base + r], 1), :]
            i_buf[pl.ds(r, 1), :] = g_ref[pl.ds(i_idx_ref[base + r], 1), :]
            return carry
        jax.lax.fori_loop(0, b_blk, gather_row, 0)

        ue = u_buf[...]                                      # (b_blk, K) f32
        ie = i_buf[...]

        # batched dot over K: transpose then sublane-reduce -> lane-dense (1, b_blk)
        prod_t = jnp.transpose(ue * ie)                      # (K, b_blk)
        pred_row = jnp.sum(prod_t, axis=0, keepdims=True)    # (1, b_blk)
        pred_ref[...] = pred_row + ge_ref[...]

        # padded tail entries (last block) must not pollute the norms
        row = base + jax.lax.broadcasted_iota(jnp.int32, (b_blk, 1), 0)
        valid = (row < total_b).astype(jnp.float32)
        unorm_ref[...] += jnp.sum(valid * ue * ue)
        inorm_ref[...] += jnp.sum(valid * ie * ie)

        @pl.when(blk == pl.num_programs(0) - 1)
        def _finalize():
            unorm_ref[...] *= inv_n_elem
            inorm_ref[...] *= inv_n_elem

    return kernel


def pred_head(G, u_rows, i_rows, ge_sum, *, b_blk=128):
    """pred = sum(G[u]*G[i],-1)+GE, plus mean-square norms of the gathered rows."""
    N_pad, K = G.shape
    B = int(u_rows.shape[0])
    nb = pl.cdiv(B, b_blk)
    B_pad = nb * b_blk
    pad = B_pad - B

    u_p = jnp.pad(u_rows, (0, pad)).astype(jnp.int32)            # pad -> row 0 (masked out)
    i_p = jnp.pad(i_rows, (0, pad)).astype(jnp.int32)
    ge_p = jnp.pad(ge_sum, (0, pad)).astype(jnp.float32).reshape(1, B_pad)

    vmem_est = 2 * N_pad * K * 4 + 4 * b_blk * K * 4 + 4 * B_pad * 4 + (1 << 20)

    pred, unorm, inorm = pl.pallas_call(
        _make_pred_head_kernel(B, b_blk, 1.0 / float(B * K)),
        out_shape=(jax.ShapeDtypeStruct((1, B_pad), jnp.float32),
                   jax.ShapeDtypeStruct((1, 1), jnp.float32),
                   jax.ShapeDtypeStruct((1, 1), jnp.float32)),
        grid_spec=pltpu.PrefetchScalarGridSpec(
            num_scalar_prefetch=2,
            grid=(nb,),
            in_specs=[pl.BlockSpec((N_pad, K), lambda b, u, i: (0, 0)),   # resident G
                      pl.BlockSpec((1, b_blk), lambda b, u, i: (0, b))],  # GE bias block
            out_specs=(pl.BlockSpec((1, b_blk), lambda b, u, i: (0, b)),  # dense pred slab
                       pl.BlockSpec((1, 1), lambda b, u, i: (0, 0)),      # u_norm acc
                       pl.BlockSpec((1, 1), lambda b, u, i: (0, 0))),     # i_norm acc
            scratch_shapes=[pltpu.VMEM((b_blk, K), jnp.float32),
                            pltpu.VMEM((b_blk, K), jnp.float32)]),
        compiler_params=_mosaic_params(("arbitrary",), vmem_est),
    )(u_p, i_p, G, ge_p)
    return pred[0, :B], unorm[0, 0], inorm[0, 0]


# ----------------------------------------------------------------------------
# GMF module: parameter init + forward
# ----------------------------------------------------------------------------
def init_gmf_params(key, n_users, n_items, embedding_k, layer, adj_tag,
                    adj_dtype=jnp.bfloat16):
    N = n_users + n_items
    N_pad = _round_up(N, 128)           # padded rows/cols are zero -> results unchanged
    k_emb, k_adj = jax.random.split(key)

    # synthetic normalized adjacency (init-time glue; mirrors the aj_norm ctor argument)
    raw = (jax.random.uniform(k_adj, (N, N)) < 0.1).astype(jnp.float32)
    raw = jnp.maximum(raw, raw.T) + jnp.eye(N, dtype=jnp.float32)   # symmetric + self-loops
    deg = jnp.sum(raw, axis=1)
    d_inv_sqrt = 1.0 / jnp.sqrt(deg)
    aj_norm = raw * d_inv_sqrt[:, None] * d_inv_sqrt[None, :]       # D^-1/2 A D^-1/2
    aj_norm = jnp.pad(aj_norm, ((0, N_pad - N), (0, N_pad - N)))

    emb = 0.01 * jax.random.normal(k_emb, (N, embedding_k), jnp.float32)
    emb = jnp.pad(emb, ((0, N_pad - N), (0, 0)))

    params = {
        "embeddings": emb,
        "user_GE": jnp.zeros((n_users,), jnp.float32),
        "item_GE": jnp.zeros((n_items,), jnp.float32),
    }
    powers = {}
    if layer >= 1:
        powers[1] = aj_norm
    if layer >= 2:
        powers[2] = powers[1] @ aj_norm     # init-time precompute in f32 (glue)
    if layer >= 3:
        powers[3] = powers[2] @ aj_norm
    for lvl, p in powers.items():
        # bf16 storage halves the HBM stream of the bandwidth-bound graph kernel
        # (documented quantization choice; pass adj_dtype=jnp.float32 for exact parity).
        params[f"aj_norm_{lvl}"] = p.astype(adj_dtype)
    if adj_tag:
        adj = jnp.pad(jnp.ones((N, N), jnp.float32), ((0, N_pad - N), (0, N_pad - N)))
        params["adj"] = adj.astype(adj_dtype)
    return params


@functools.partial(jax.jit, static_argnames=("n_users", "layer", "adj_tag"))
def gmf_forward(params, user_index, item_index, *, n_users, layer, adj_tag):
    assert layer in (0, 1, 2, 3), "Wrong GMF layer setting!!! Choosing From [0,1,2,3]"
    E = params["embeddings"]
    if layer == 0:
        G = E.astype(jnp.float32)
    else:
        A = params[f"aj_norm_{layer}"]
        G = graph_embeddings(A, E, params["adj"] if adj_tag else None)

    # scalar-side glue: row indices + GE biases (B scalars), consumed via SMEM prefetch
    u_rows = user_index.astype(jnp.int32)
    i_rows = (item_index + n_users).astype(jnp.int32)
    ge_sum = (params["user_GE"][user_index] + params["item_GE"][item_index]).astype(jnp.float32)

    return pred_head(G, u_rows, i_rows, ge_sum)


# ----------------------------------------------------------------------------
# demo / self-check
# ----------------------------------------------------------------------------
if __name__ == "__main__":
    n_users, n_items, embedding_k = 64, 64, 32
    layer = 2
    batch = 8

    key = jax.random.PRNGKey(0)
    k_par, k_u, k_i = jax.random.split(key, 3)
    params = init_gmf_params(k_par, n_users, n_items, embedding_k, layer, adj_tag=True)

    user_index = jax.random.randint(k_u, (batch,), 0, n_users)
    item_index = jax.random.randint(k_i, (batch,), 0, n_items)

    def reference(ref_layer, adj_tag):
        # mirrors the kernel's documented precision policy (bf16 A/adj/E, f32 accumulate)
        if ref_layer == 0:
            G_ref = params["embeddings"]
        else:
            A = params[f"aj_norm_{ref_layer}"].astype(jnp.float32)
            W = A * params["adj"].astype(jnp.float32) if adj_tag else A
            E_bf = params["embeddings"].astype(jnp.bfloat16).astype(jnp.float32)
            G_ref = W @ E_bf
        ue = G_ref[user_index]
        ie = G_ref[item_index + n_users]
        pred = (ue * ie).sum(1) + params["user_GE"][user_index] + params["item_GE"][item_index]
        return pred, jnp.mean(ue ** 2), jnp.mean(ie ** 2)

    # exercise the masked / un-masked graph kernels and the layer-0 (head-only) path
    for lyr, adj_tag in ((layer, True), (layer, False), (0, False)):
        pred, u_norm, i_norm = gmf_forward(params, user_index, item_index,
                                           n_users=n_users, layer=lyr, adj_tag=adj_tag)
        jax.block_until_ready((pred, u_norm, i_norm))

        pred_ref, u_ref, i_ref = reference(lyr, adj_tag)
        assert jnp.allclose(pred, pred_ref, rtol=1e-3, atol=1e-6), \
            f"pred mismatch (layer={lyr}, adj_tag={adj_tag})"
        assert jnp.allclose(u_norm, u_ref, rtol=1e-3, atol=1e-8), \
            f"u_norm mismatch (layer={lyr}, adj_tag={adj_tag})"
        assert jnp.allclose(i_norm, i_ref, rtol=1e-3, atol=1e-8), \
            f"i_norm mismatch (layer={lyr}, adj_tag={adj_tag})"

    print("KERNEL_OK")
</pallas_src>

<mosaic_0001>
module attributes {stable_mosaic.version = 11 : i64} {
  func.func @kernel(%arg0: i32, %arg1: i32, %arg2: memref<128x128xbf16, #tpu.memory_space<vmem>>, %arg3: memref<128x128xbf16, #tpu.memory_space<vmem>>, %arg4: memref<128x32xbf16, #tpu.memory_space<vmem>>, %arg5: memref<128x32xf32, #tpu.memory_space<vmem>>) attributes {dimension_semantics = [#tpu.dimension_semantics<parallel>, #tpu.dimension_semantics<arbitrary>], iteration_bounds = array<i64: 1, 1>, scalar_prefetch = 0 : i64, scratch_operands = 0 : i64, tpu.core_type = #tpu.core_type<tc>, window_params = [{transform_indices = @transform_0, window_bounds = array<i64: 128, 128>}, {transform_indices = @transform_1, window_bounds = array<i64: 128, 128>}, {pipeline_mode = #tpu.pipeline_mode<synchronous>, transform_indices = @transform_2, window_bounds = array<i64: 128, 32>}, {transform_indices = @transform_3, window_bounds = array<i64: 128, 32>}]} {
    %c0_i32 = arith.constant 0 : i32
    %0 = arith.cmpi eq, %arg1, %c0_i32 : i32
    %1 = arith.extui %0 : i1 to i32
    %c0_i32_0 = arith.constant 0 : i32
    %2 = arith.cmpi ne, %1, %c0_i32_0 : i32
    scf.if %2 {
      %cst_9 = arith.constant 0.000000e+00 : f32
      %14 = vector.broadcast %cst_9 : f32 to vector<128x32xf32>
      %c0_10 = arith.constant 0 : index
      %c0_11 = arith.constant 0 : index
      %15 = vector.load %arg5[%c0_10, %c0_11] : memref<128x32xf32, #tpu.memory_space<vmem>>, vector<128x32xf32>
      tpu.vector_store %arg5[%c0_10, %c0_11], %14 {strides = array<i32>} : memref<128x32xf32, #tpu.memory_space<vmem>>, vector<128x32xf32>,
    } else {
    }
    %c0 = arith.constant 0 : index
    %c0_1 = arith.constant 0 : index
    %3 = vector.load %arg2[%c0, %c0_1] : memref<128x128xbf16, #tpu.memory_space<vmem>>, vector<128x128xbf16>
    %c0_2 = arith.constant 0 : index
    %c0_3 = arith.constant 0 : index
    %4 = vector.load %arg3[%c0_2, %c0_3] : memref<128x128xbf16, #tpu.memory_space<vmem>>, vector<128x128xbf16>
    %5 = arith.mulf %3, %4 : vector<128x128xbf16>
    %c128_i32 = arith.constant 128 : i32
    %6 = arith.muli %arg1, %c128_i32 : i32
    %7 = tpu.assume_multiple %6, 128 : i32
    %c0_4 = arith.constant 0 : index
    %c0_5 = arith.constant 0 : index
    %8 = vector.load %arg5[%c0_4, %c0_5] : memref<128x32xf32, #tpu.memory_space<vmem>>, vector<128x32xf32>
    %9 = arith.index_cast %7 : i32 to index
    %c0_6 = arith.constant 0 : index
    %10 = vector.load %arg4[%9, %c0_6] : memref<128x32xbf16, #tpu.memory_space<vmem>>, vector<128x32xbf16>
    %cst = arith.constant dense<0.000000e+00> : vector<128x32xf32>
    %11 = tpu.matmul %5, %10, %cst {dimension_numbers = #tpu.dot_dimension_numbers<[1], [0], [0], [1], [0, 0, 1, 1], [], []>} : vector<128x128xbf16>, vector<128x32xbf16>, vector<128x32xf32> -> vector<128x32xf32>
    %12 = arith.addf %8, %11 : vector<128x32xf32>
    %c0_7 = arith.constant 0 : index
    %c0_8 = arith.constant 0 : index
    %13 = vector.load %arg5[%c0_7, %c0_8] : memref<128x32xf32, #tpu.memory_space<vmem>>, vector<128x32xf32>
    tpu.vector_store %arg5[%c0_7, %c0_8], %12 {strides = array<i32>} : memref<128x32xf32, #tpu.memory_space<vmem>>, vector<128x32xf32>,
    return
  }
  func.func @transform_0(%arg0: i32, %arg1: i32) -> (i32, i32) {
    %c0_i32 = arith.constant 0 : i32
    return %arg0, %arg1 : i32, i32
  }
  func.func @transform_1(%arg0: i32, %arg1: i32) -> (i32, i32) {
    %c0_i32 = arith.constant 0 : i32
    return %arg0, %arg1 : i32, i32
  }
  func.func @transform_2(%arg0: i32, %arg1: i32) -> (i32, i32) {
    %c0_i32 = arith.constant 0 : i32
    %c0_i32_0 = arith.constant 0 : i32
    %c0_i32_1 = arith.constant 0 : i32
    return %c0_i32, %c0_i32_0 : i32, i32
  }
  func.func @transform_3(%arg0: i32, %arg1: i32) -> (i32, i32) {
    %c0_i32 = arith.constant 0 : i32
    %c0_i32_0 = arith.constant 0 : i32
    return %arg0, %c0_i32 : i32, i32
  }
}

module attributes {stable_mosaic.version = 11 : i64} {
  func.func @kernel(%arg0: i32, %arg1: memref<128xi32, #tpu.memory_space<smem>>, %arg2: memref<128xi32, #tpu.memory_space<smem>>, %arg3: memref<128x32xf32, #tpu.memory_space<vmem>>, %arg4: memref<1x128xf32, #tpu.memory_space<vmem>>, %arg5: memref<1x128xf32, #tpu.memory_space<vmem>>, %arg6: memref<1x1xf32, #tpu.memory_space<vmem>>, %arg7: memref<1x1xf32, #tpu.memory_space<vmem>>, %arg8: memref<128x32xf32, #tpu.memory_space<vmem>>, %arg9: memref<128x32xf32, #tpu.memory_space<vmem>>) attributes {dimension_semantics = [#tpu.dimension_semantics<arbitrary>], iteration_bounds = array<i64: 1>, scalar_prefetch = 2 : i64, scratch_operands = 2 : i64, tpu.core_type = #tpu.core_type<tc>, window_params = [{pipeline_mode = #tpu.pipeline_mode<synchronous>, transform_indices = @transform_0, window_bounds = array<i64: 128, 32>}, {transform_indices = @transform_1, window_bounds = array<i64: 1, 128>}, {transform_indices = @transform_2, window_bounds = array<i64: 1, 128>}, {pipeline_mode = #tpu.pipeline_mode<synchronous>, transform_indices = @transform_3, window_bounds = array<i64: 1, 1>}, {pipeline_mode = #tpu.pipeline_mode<synchronous>, transform_indices = @transform_4, window_bounds = array<i64: 1, 1>}]} {
    %c128_i32 = arith.constant 128 : i32
    %0 = arith.muli %arg0, %c128_i32 : i32
    %c0_i32 = arith.constant 0 : i32
    %1 = arith.cmpi eq, %arg0, %c0_i32 : i32
    %2 = arith.extui %1 : i1 to i32
    %c0_i32_0 = arith.constant 0 : i32
    %3 = arith.cmpi ne, %2, %c0_i32_0 : i32
    scf.if %3 {
      %cst_23 = arith.constant 0.000000e+00 : f32
      %46 = vector.broadcast %cst_23 : f32 to vector<1x1xf32>
      %c0_24 = arith.constant 0 : index
      %c0_25 = arith.constant 0 : index
      %47 = vector.load %arg6[%c0_24, %c0_25] : memref<1x1xf32, #tpu.memory_space<vmem>>, vector<1x1xf32>
      tpu.vector_store %arg6[%c0_24, %c0_25], %46 {strides = array<i32>} : memref<1x1xf32, #tpu.memory_space<vmem>>, vector<1x1xf32>,
      %cst_26 = arith.constant 0.000000e+00 : f32
      %48 = vector.broadcast %cst_26 : f32 to vector<1x1xf32>
      %c0_27 = arith.constant 0 : index
      %c0_28 = arith.constant 0 : index
      %49 = vector.load %arg7[%c0_27, %c0_28] : memref<1x1xf32, #tpu.memory_space<vmem>>, vector<1x1xf32>
      tpu.vector_store %arg7[%c0_27, %c0_28], %48 {strides = array<i32>} : memref<1x1xf32, #tpu.memory_space<vmem>>, vector<1x1xf32>,
    } else {
    }
    %c0_i32_1 = arith.constant 0 : i32
    %c128_i32_2 = arith.constant 128 : i32
    %4 = arith.addi %c0_i32_1, %c128_i32_2 : i32
    %c1_i32 = arith.constant 1 : i32
    scf.for %arg10 = %c0_i32_1 to %4 step %c1_i32  : i32 {
      %46 = arith.addi %0, %arg10 : i32
      %47 = arith.index_cast %46 : i32 to index
      %48 = memref.load %arg1[%47] : memref<128xi32, #tpu.memory_space<smem>>
      %49 = arith.index_cast %48 : i32 to index
      %c0_23 = arith.constant 0 : index
      %50 = vector.load %arg3[%49, %c0_23] : memref<128x32xf32, #tpu.memory_space<vmem>>, vector<1x32xf32>
      %51 = arith.index_cast %arg10 : i32 to index
      %c0_24 = arith.constant 0 : index
      %52 = vector.load %arg8[%51, %c0_24] : memref<128x32xf32, #tpu.memory_space<vmem>>, vector<1x32xf32>
      tpu.vector_store %arg8[%51, %c0_24], %50 {strides = array<i32>} : memref<128x32xf32, #tpu.memory_space<vmem>>, vector<1x32xf32>,
      %53 = arith.addi %0, %arg10 : i32
      %54 = arith.index_cast %53 : i32 to index
      %55 = memref.load %arg2[%54] : memref<128xi32, #tpu.memory_space<smem>>
      %56 = arith.index_cast %55 : i32 to index
      %c0_25 = arith.constant 0 : index
      %57 = vector.load %arg3[%56, %c0_25] : memref<128x32xf32, #tpu.memory_space<vmem>>, vector<1x32xf32>
      %58 = arith.index_cast %arg10 : i32 to index
      %c0_26 = arith.constant 0 : index
      %59 = vector.load %arg9[%58, %c0_26] : memref<128x32xf32, #tpu.memory_space<vmem>>, vector<1x32xf32>
      tpu.vector_store %arg9[%58, %c0_26], %57 {strides = array<i32>} : memref<128x32xf32, #tpu.memory_space<vmem>>, vector<1x32xf32>,
    }
    %c128_i32_3 = arith.constant 128 : i32
    %c0 = arith.constant 0 : index
    %c0_4 = arith.constant 0 : index
    %5 = vector.load %arg8[%c0, %c0_4] : memref<128x32xf32, #tpu.memory_space<vmem>>, vector<128x32xf32>
    %c0_5 = arith.constant 0 : index
    %c0_6 = arith.constant 0 : index
    %6 = vector.load %arg9[%c0_5, %c0_6] : memref<128x32xf32, #tpu.memory_space<vmem>>, vector<128x32xf32>
    %7 = arith.mulf %5, %6 : vector<128x32xf32>
    %8 = tpu.transpose %7, [1, 0] : vector<128x32xf32> -> vector<32x128xf32>
    %cst = arith.constant dense<0.000000e+00> : vector<128xf32>
    %9 = vector.multi_reduction <add>, %8, %cst [0] : vector<32x128xf32> to vector<128xf32>
    %10 = vector.shape_cast %9 : vector<128xf32> to vector<1x128xf32>
    %c0_7 = arith.constant 0 : index
    %c0_8 = arith.constant 0 : index
    %11 = vector.load %arg4[%c0_7, %c0_8] : memref<1x128xf32, #tpu.memory_space<vmem>>, vector<1x128xf32>
    %12 = arith.addf %10, %11 : vector<1x128xf32>
    %c0_9 = arith.constant 0 : index
    %c0_10 = arith.constant 0 : index
    %13 = vector.load %arg5[%c0_9, %c0_10] : memref<1x128xf32, #tpu.memory_space<vmem>>, vector<1x128xf32>
    tpu.vector_store %arg5[%c0_9, %c0_10], %12 {strides = array<i32>} : memref<1x128xf32, #tpu.memory_space<vmem>>, vector<1x128xf32>,
    %14 = tpu.iota {dimensions = array<i32: 0>} : vector<128x1xi32>
    %15 = vector.broadcast %0 : i32 to vector<128x1xi32>
    %16 = arith.addi %15, %14 : vector<128x1xi32>
    %c8_i32 = arith.constant 8 : i32
    %17 = vector.broadcast %c8_i32 : i32 to vector<128x1xi32>
    %18 = arith.cmpi slt, %16, %17 : vector<128x1xi32>
    %19 = arith.extui %18 : vector<128x1xi1> to vector<128x1xi32>
    %20 = arith.sitofp %19 : vector<128x1xi32> to vector<128x1xf32>
    %c0_11 = arith.constant 0 : index
    %c0_12 = arith.constant 0 : index
    %21 = vector.load %arg6[%c0_11, %c0_12] : memref<1x1xf32, #tpu.memory_space<vmem>>, vector<1x1xf32>
    %22 = vector.broadcast %20 : vector<128x1xf32> to vector<128x32xf32>
    %23 = arith.mulf %22, %5 : vector<128x32xf32>
    %24 = arith.mulf %23, %5 : vector<128x32xf32>
    %25 = vector.shape_cast %24 : vector<128x32xf32> to vector<1x128x32xf32>
    %cst_13 = arith.constant dense<0.000000e+00> : vector<1xf32>
    %26 = vector.multi_reduction <add>, %25, %cst_13 [1, 2] : vector<1x128x32xf32> to vector<1xf32>
    %27 = vector.shape_cast %26 : vector<1xf32> to vector<1x1x1xf32>
    %28 = vector.extract %27[0, 0, 0] : f32 from vector<1x1x1xf32>
    %29 = vector.broadcast %28 : f32 to vector<1x1xf32>
    %30 = arith.addf %21, %29 : vector<1x1xf32>
    %c0_14 = arith.constant 0 : index
    %c0_15 = arith.constant 0 : index
    %31 = vector.load %arg6[%c0_14, %c0_15] : memref<1x1xf32, #tpu.memory_space<vmem>>, vector<1x1xf32>
    tpu.vector_store %arg6[%c0_14, %c0_15], %30 {strides = array<i32>} : memref<1x1xf32, #tpu.memory_space<vmem>>, vector<1x1xf32>,
    %c0_16 = arith.constant 0 : index
    %c0_17 = arith.constant 0 : index
    %32 = vector.load %arg7[%c0_16, %c0_17] : memref<1x1xf32, #tpu.memory_space<vmem>>, vector<1x1xf32>
    %33 = vector.broadcast %20 : vector<128x1xf32> to vector<128x32xf32>
    %34 = arith.mulf %33, %6 : vector<128x32xf32>
    %35 = arith.mulf %34, %6 : vector<128x32xf32>
    %36 = vector.shape_cast %35 : vector<128x32xf32> to vector<1x128x32xf32>
    %cst_18 = arith.constant dense<0.000000e+00> : vector<1xf32>
    %37 = vector.multi_reduction <add>, %36, %cst_18 [1, 2] : vector<1x128x32xf32> to vector<1xf32>
    %38 = vector.shape_cast %37 : vector<1xf32> to vector<1x1x1xf32>
    %39 = vector.extract %38[0, 0, 0] : f32 from vector<1x1x1xf32>
    %40 = vector.broadcast %39 : f32 to vector<1x1xf32>
    %41 = arith.addf %32, %40 : vector<1x1xf32>
    %c0_19 = arith.constant 0 : index
    %c0_20 = arith.constant 0 : index
    %42 = vector.load %arg7[%c0_19, %c0_20] : memref<1x1xf32, #tpu.memory_space<vmem>>, vector<1x1xf32>
    tpu.vector_store %arg7[%c0_19, %c0_20], %41 {strides = array<i32>} : memref<1x1xf32, #tpu.memory_space<vmem>>, vector<1x1xf32>,
    %c0_i32_21 = arith.constant 0 : i32
    %43 = arith.cmpi eq, %arg0, %c0_i32_21 : i32
    %44 = arith.extui %43 : i1 to i32
    %c0_i32_22 = arith.constant 0 : i32
    %45 = arith.cmpi ne, %44, %c0_i32_22 : i32
    scf.if %45 {
      %c0_23 = arith.constant 0 : index
      %c0_24 = arith.constant 0 : index
      %46 = vector.load %arg6[%c0_23, %c0_24] : memref<1x1xf32, #tpu.memory_space<vmem>>, vector<1x1xf32>
      %cst_25 = arith.constant 3.906250e-03 : f32
      %47 = vector.broadcast %cst_25 : f32 to vector<1x1xf32>
      %48 = arith.mulf %46, %47 : vector<1x1xf32>
      %c0_26 = arith.constant 0 : index
      %c0_27 = arith.constant 0 : index
      %49 = vector.load %arg6[%c0_26, %c0_27] : memref<1x1xf32, #tpu.memory_space<vmem>>, vector<1x1xf32>
      tpu.vector_store %arg6[%c0_26, %c0_27], %48 {strides = array<i32>} : memref<1x1xf32, #tpu.memory_space<vmem>>, vector<1x1xf32>,
      %c0_28 = arith.constant 0 : index
      %c0_29 = arith.constant 0 : index
      %50 = vector.load %arg7[%c0_28, %c0_29] : memref<1x1xf32, #tpu.memory_space<vmem>>, vector<1x1xf32>
      %cst_30 = arith.constant 3.906250e-03 : f32
      %51 = vector.broadcast %cst_30 : f32 to vector<1x1xf32>
      %52 = arith.mulf %50, %51 : vector<1x1xf32>
      %c0_31 = arith.constant 0 : index
      %c0_32 = arith.constant 0 : index
      %53 = vector.load %arg7[%c0_31, %c0_32] : memref<1x1xf32, #tpu.memory_space<vmem>>, vector<1x1xf32>
      tpu.vector_store %arg7[%c0_31, %c0_32], %52 {strides = array<i32>} : memref<1x1xf32, #tpu.memory_space<vmem>>, vector<1x1xf32>,
    } else {
    }
    return
  }
  func.func @transform_0(%arg0: i32, %arg1: memref<128xi32, #tpu.memory_space<smem>>, %arg2: memref<128xi32, #tpu.memory_space<smem>>) -> (i32, i32) {
    %c0_i32 = arith.constant 0 : i32
    %c0_i32_0 = arith.constant 0 : i32
    %c0_i32_1 = arith.constant 0 : i32
    return %c0_i32, %c0_i32_0 : i32, i32
  }
  func.func @transform_1(%arg0: i32, %arg1: memref<128xi32, #tpu.memory_space<smem>>, %arg2: memref<128xi32, #tpu.memory_space<smem>>) -> (i32, i32) {
    %c0_i32 = arith.constant 0 : i32
    %c0_i32_0 = arith.constant 0 : i32
    return %c0_i32, %arg0 : i32, i32
  }
  func.func @transform_2(%arg0: i32, %arg1: memref<128xi32, #tpu.memory_space<smem>>, %arg2: memref<128xi32, #tpu.memory_space<smem>>) -> (i32, i32) {
    %c0_i32 = arith.constant 0 : i32
    %c0_i32_0 = arith.constant 0 : i32
    return %c0_i32, %arg0 : i32, i32
  }
  func.func @transform_3(%arg0: i32, %arg1: memref<128xi32, #tpu.memory_space<smem>>, %arg2: memref<128xi32, #tpu.memory_space<smem>>) -> (i32, i32) {
    %c0_i32 = arith.constant 0 : i32
    %c0_i32_0 = arith.constant 0 : i32
    %c0_i32_1 = arith.constant 0 : i32
    return %c0_i32, %c0_i32_0 : i32, i32
  }
  func.func @transform_4(%arg0: i32, %arg1: memref<128xi32, #tpu.memory_space<smem>>, %arg2: memref<128xi32, #tpu.memory_space<smem>>) -> (i32, i32) {
    %c0_i32 = arith.constant 0 : i32
    %c0_i32_0 = arith.constant 0 : i32
    %c0_i32_1 = arith.constant 0 : i32
    return %c0_i32, %c0_i32_0 : i32, i32
  }
}

</mosaic_0001>

<llo_original>
// kernel: gmf_forward.2
$region0: #{gmf_forward.2}
  #allocation0 [shape = 'u32[]', space=smem, size = 0x4, offset = 0x4, fixed_abs, tag = 'smem constant byte address 0x4 - core index']
  #allocation1 [shape = 'u32[72,128]{1,0:T(1,128)}', space=vmem, size = 0x9000, scoped, tag = 'internal scratch']
  %s0 = inlined_call_operand.vmem [shape: bf16[128,128], index: 0, kind: input, shape index: {}]
  %s1 = inlined_call_operand.vmem [shape: bf16[128,128], index: 1, kind: input, shape index: {}]
  %s2 = inlined_call_operand.vmem [shape: bf16[128,32], index: 2, kind: input, shape index: {}]
  %s3 = inlined_call_operand.vmem [shape: f32[128,32], index: 3, kind: output, shape index: {}]
  %s4 = sld [smem:[#allocation0]]
  $region26: #{gmf_forward.2} parent=0
    _
  %s6 = ssub.s32 1, %s4
  %s7 = scalar_select 0, %s6, %s4
  // Predicated region
  $region2: #{gmf_forward.2} parent=0 // pred_check
    _
  $region3: #{gmf_forward.2} parent=0 // pred_check_branch
    %9 = sbr.rel (0) target = $region5
  $region4: #{gmf_forward.2} parent=0 // pred_region
    _
  $region5: #{gmf_forward.2} parent=0 // pred_fallthru
    _
  // Predicated region
  $region6: #{gmf_forward.2} parent=0 // pred_check
    _
  $region7: #{gmf_forward.2} parent=0 // pred_check_branch
    %11 = sbr.rel (0) target = $region9
  $region8: #{gmf_forward.2} parent=0 // pred_region
    _
  $region9: #{gmf_forward.2} parent=0 // pred_fallthru
    _
  // Predicated region
  $region10: #{gmf_forward.2} parent=0 // pred_check
    _
  $region11: #{gmf_forward.2} parent=0 // pred_check_branch
    %13 = sbr.rel (0) target = $region13
  $region12: #{gmf_forward.2} parent=0 // pred_region
    _
  $region13: #{gmf_forward.2} parent=0 // pred_fallthru
    _
  %p14 = scmp.eq.s32.totalorder 0, 0
  // Predicated region
  $region14: #{gmf_forward.2} parent=0 // pred_check
    %p15 = pneg %p14
  $region15: #{gmf_forward.2} parent=0 // pred_check_branch
    %17 = sbr.rel (%p15) target = $region17
  $region16: #{gmf_forward.2} parent=0 // pred_region
    %vm18 = vcmask 261120
    %19 = vst.msk [vmem:[%s3] sm:$0xff] %vm18, 0.0
    %20 = vst.msk [vmem:[%s3 + $0x8] sm:$0xff] %vm18, 0.0
    %21 = vst.msk [vmem:[%s3 + $0x10] sm:$0xff] %vm18, 0.0
    %22 = vst.msk [vmem:[%s3 + $0x18] sm:$0xff] %vm18, 0.0
    %23 = vst.msk [vmem:[%s3 + $0x20] sm:$0xff] %vm18, 0.0
    %24 = vst.msk [vmem:[%s3 + $0x28] sm:$0xff] %vm18, 0.0
    %25 = vst.msk [vmem:[%s3 + $0x30] sm:$0xff] %vm18, 0.0
    %26 = vst.msk [vmem:[%s3 + $0x38] sm:$0xff] %vm18, 0.0
    %27 = vst.msk [vmem:[%s3 + $0x40] sm:$0xff] %vm18, 0.0
    %28 = vst.msk [vmem:[%s3 + $0x48] sm:$0xff] %vm18, 0.0
    %29 = vst.msk [vmem:[%s3 + $0x50] sm:$0xff] %vm18, 0.0
    %30 = vst.msk [vmem:[%s3 + $0x58] sm:$0xff] %vm18, 0.0
    %31 = vst.msk [vmem:[%s3 + $0x60] sm:$0xff] %vm18, 0.0
    %32 = vst.msk [vmem:[%s3 + $0x68] sm:$0xff] %vm18, 0.0
    %33 = vst.msk [vmem:[%s3 + $0x70] sm:$0xff] %vm18, 0.0
    %34 = vst.msk [vmem:[%s3 + $0x78] sm:$0xff] %vm18, 0.0
  $region17: #{gmf_forward.2} parent=0 // pred_fallthru
    _
  %v35 = vld [vmem:[%s0] sm:$0xf]
  %v36 = vld [vmem:[%s0 + $0x4] sm:$0xf]
  %v37 = vld [vmem:[%s0 + $0x8] sm:$0xf]
  %v38 = vld [vmem:[%s0 + $0xc] sm:$0xf]
  %v39 = vld [vmem:[%s0 + $0x10] sm:$0xf]
  %v40 = vld [vmem:[%s0 + $0x14] sm:$0xf]
  %v41 = vld [vmem:[%s0 + $0x18] sm:$0xf]
  %v42 = vld [vmem:[%s0 + $0x1c] sm:$0xf]
  %v43 = vld [vmem:[%s0 + $0x20] sm:$0xf]
  %v44 = vld [vmem:[%s0 + $0x24] sm:$0xf]
  %v45 = vld [vmem:[%s0 + $0x28] sm:$0xf]
  %v46 = vld [vmem:[%s0 + $0x2c] sm:$0xf]
  %v47 = vld [vmem:[%s0 + $0x30] sm:$0xf]
  %v48 = vld [vmem:[%s0 + $0x34] sm:$0xf]
  %v49 = vld [vmem:[%s0 + $0x38] sm:$0xf]
  %v50 = vld [vmem:[%s0 + $0x3c] sm:$0xf]
  %v51 = vld [vmem:[%s1] sm:$0xf]
  %v52 = vld [vmem:[%s1 + $0x4] sm:$0xf]
  %v53 = vld [vmem:[%s1 + $0x8] sm:$0xf]
  %v54 = vld [vmem:[%s1 + $0xc] sm:$0xf]
  %v55 = vld [vmem:[%s1 + $0x10] sm:$0xf]
  %v56 = vld [vmem:[%s1 + $0x14] sm:$0xf]
  %v57 = vld [vmem:[%s1 + $0x18] sm:$0xf]
  %v58 = vld [vmem:[%s1 + $0x1c] sm:$0xf]
  %v59 = vld [vmem:[%s1 + $0x20] sm:$0xf]
  %v60 = vld [vmem:[%s1 + $0x24] sm:$0xf]
  %v61 = vld [vmem:[%s1 + $0x28] sm:$0xf]
  %v62 = vld [vmem:[%s1 + $0x2c] sm:$0xf]
  %v63 = vld [vmem:[%s1 + $0x30] sm:$0xf]
  %v64 = vld [vmem:[%s1 + $0x34] sm:$0xf]
  %v65 = vld [vmem:[%s1 + $0x38] sm:$0xf]
  %v66 = vld [vmem:[%s1 + $0x3c] sm:$0xf]
  %v67 = vunpack.c.l.bf16 %v35
  %v68 = vunpack.c.l.bf16 %v36
  %v69 = vunpack.c.l.bf16 %v37
  %v70 = vunpack.c.l.bf16 %v38
  %v71 = vunpack.c.l.bf16 %v39
  %v72 = vunpack.c.l.bf16 %v40
  %v73 = vunpack.c.l.bf16 %v41
  %v74 = vunpack.c.l.bf16 %v42
  %v75 = vunpack.c.l.bf16 %v43
  %v76 = vunpack.c.l.bf16 %v44
  %v77 = vunpack.c.l.bf16 %v45
  %v78 = vunpack.c.l.bf16 %v46
  %v79 = vunpack.c.l.bf16 %v47
  %v80 = vunpack.c.l.bf16 %v48
  %v81 = vunpack.c.l.bf16 %v49
  %v82 = vunpack.c.l.bf16 %v50
  %v83 = vunpack.c.l.bf16 %v51
  %v84 = vunpack.c.l.bf16 %v52
  %v85 = vunpack.c.l.bf16 %v53
  %v86 = vunpack.c.l.bf16 %v54
  %v87 = vunpack.c.l.bf16 %v55
  %v88 = vunpack.c.l.bf16 %v56
  %v89 = vunpack.c.l.bf16 %v57
  %v90 = vunpack.c.l.bf16 %v58
  %v91 = vunpack.c.l.bf16 %v59
  %v92 = vunpack.c.l.bf16 %v60
  %v93 = vunpack.c.l.bf16 %v61
  %v94 = vunpack.c.l.bf16 %v62
  %v95 = vunpack.c.l.bf16 %v63
  %v96 = vunpack.c.l.bf16 %v64
  %v97 = vunpack.c.l.bf16 %v65
  %v98 = vunpack.c.l.bf16 %v66
  %v99 = vmul.f32 %v67, %v83
  %v100 = vmul.f32 %v68, %v84
  %v101 = vmul.f32 %v69, %v85
  %v102 = vmul.f32 %v70, %v86
  %v103 = vmul.f32 %v71, %v87
  %v104 = vmul.f32 %v72, %v88
  %v105 = vmul.f32 %v73, %v89
  %v106 = vmul.f32 %v74, %v90
  %v107 = vmul.f32 %v75, %v91
  %v108 = vmul.f32 %v76, %v92
  %v109 = vmul.f32 %v77, %v93
  %v110 = vmul.f32 %v78, %v94
  %v111 = vmul.f32 %v79, %v95
  %v112 = vmul.f32 %v80, %v96
  %v113 = vmul.f32 %v81, %v97
  %v114 = vmul.f32 %v82, %v98
  %v115 = vpack.c.bf16 %v100, %v99
  %v116 = vpack.c.bf16 %v102, %v101
  %v117 = vpack.c.bf16 %v104, %v103
  %v118 = vpack.c.bf16 %v106, %v105
  %v119 = vpack.c.bf16 %v108, %v107
  %v120 = vpack.c.bf16 %v110, %v109
  %v121 = vpack.c.bf16 %v112, %v111
  %v122 = vpack.c.bf16 %v114, %v113
  %s123 = smul.u32 0, 128
  %v124 = vld [vmem:[%s3] sm:$0xff]
  %v125 = vld [vmem:[%s3 + $0x8] sm:$0xff]
  %v126 = vld [vmem:[%s3 + $0x10] sm:$0xff]
  %v127 = vld [vmem:[%s3 + $0x18] sm:$0xff]
  %v128 = vld [vmem:[%s3 + $0x20] sm:$0xff]
  %v129 = vld [vmem:[%s3 + $0x28] sm:$0xff]
  %v130 = vld [vmem:[%s3 + $0x30] sm:$0xff]
  %v131 = vld [vmem:[%s3 + $0x38] sm:$0xff]
  %v132 = vld [vmem:[%s3 + $0x40] sm:$0xff]
  %v133 = vld [vmem:[%s3 + $0x48] sm:$0xff]
  %v134 = vld [vmem:[%s3 + $0x50] sm:$0xff]
  %v135 = vld [vmem:[%s3 + $0x58] sm:$0xff]
  %v136 = vld [vmem:[%s3 + $0x60] sm:$0xff]
  %v137 = vld [vmem:[%s3 + $0x68] sm:$0xff]
  %v138 = vld [vmem:[%s3 + $0x70] sm:$0xff]
  %v139 = vld [vmem:[%s3 + $0x78] sm:$0xff]
  %s140 = sshra.s32 %s123, 3
  %s141 = sand.u32 %s123, 7
  %s142 = smul.addr %s140, 4
  %s143 = scalar_lea.vmem %s2, %s142
  %v144 = vld [vmem:[%s143] sm:$0xf]
  %v145 = vld [vmem:[%s143 + $0x4] sm:$0xf]
  %v146 = vld [vmem:[%s143 + $0x8] sm:$0xf]
  %v147 = vld [vmem:[%s143 + $0xc] sm:$0xf]
  %v148 = vld [vmem:[%s143 + $0x10] sm:$0xf]
  %v149 = vld [vmem:[%s143 + $0x14] sm:$0xf]
  %v150 = vld [vmem:[%s143 + $0x18] sm:$0xf]
  %v151 = vld [vmem:[%s143 + $0x1c] sm:$0xf]
  %v152 = vld [vmem:[%s143 + $0x20] sm:$0xf]
  %v153 = vld [vmem:[%s143 + $0x24] sm:$0xf]
  %v154 = vld [vmem:[%s143 + $0x28] sm:$0xf]
  %v155 = vld [vmem:[%s143 + $0x2c] sm:$0xf]
  %v156 = vld [vmem:[%s143 + $0x30] sm:$0xf]
  %v157 = vld [vmem:[%s143 + $0x34] sm:$0xf]
  %v158 = vld [vmem:[%s143 + $0x38] sm:$0xf]
  %v159 = vld [vmem:[%s143 + $0x3c] sm:$0xf]
  %v176 = vunpack.c.l.b16 %v144
  %v177 = vunpack.c.l.b16 %v145
  %v178 = vunpack.c.l.b16 %v146
  %v179 = vunpack.c.l.b16 %v147
  %v180 = vunpack.c.l.b16 %v148
  %v181 = vunpack.c.l.b16 %v149
  %v182 = vunpack.c.l.b16 %v150
  %v183 = vunpack.c.l.b16 %v151
  %v184 = vunpack.c.l.b16 %v152
  %v185 = vunpack.c.l.b16 %v153
  %v186 = vunpack.c.l.b16 %v154
  %v187 = vunpack.c.l.b16 %v155
  %v188 = vunpack.c.l.b16 %v156
  %v189 = vunpack.c.l.b16 %v157
  %v190 = vunpack.c.l.b16 %v158
  %v191 = vunpack.c.l.b16 %v159
  %v192 = vpack.c.b16 %v177, %v176
  %v193 = vpack.c.b16 %v179, %v178
  %v194 = vpack.c.b16 %v181, %v180
  %v195 = vpack.c.b16 %v183, %v182
  %v196 = vpack.c.b16 %v185, %v184
  %v197 = vpack.c.b16 %v187, %v186
  %v198 = vpack.c.b16 %v189, %v188
  %v199 = vpack.c.b16 %v191, %v190
  %208 = vmatpush.bf16.msra.mxu0 %v199
  %209 = vmatpush.bf16.msra.mxu0 %v198
  %210 = vmatpush.bf16.msra.mxu0 %v197
  %211 = vmatpush.bf16.msra.mxu0 %v196
  %212 = vmatpush.bf16.msra.mxu0 %v195
  %213 = vmatpush.bf16.msra.mxu0 %v194
  %214 = vmatpush.bf16.msra.mxu0 %v193
  %215 = vmatpush.bf16.msra.mxu0 %v192
  %216 = vmatmul.bf16.gmra.mxu0 %v115
  %v217 = vpop.f32.mrf.mxu0
  %v218 = vadd.f32 0.0, %v217
  %v219 = vpop.f32.mrf.mxu0
  %v220 = vadd.f32 0.0, %v219
  %221 = vmatmul.bf16.gmra.mxu0 %v116
  %v222 = vpop.f32.mrf.mxu0
  %v223 = vadd.f32 0.0, %v222
  %v224 = vpop.f32.mrf.mxu0
  %v225 = vadd.f32 0.0, %v224
  %226 = vmatmul.bf16.gmra.mxu0 %v117
  %v227 = vpop.f32.mrf.mxu0
  %v228 = vadd.f32 0.0, %v227
  %v229 = vpop.f32.mrf.mxu0
  %v230 = vadd.f32 0.0, %v229
  %231 = vmatmul.bf16.gmra.mxu0 %v118
  %v232 = vpop.f32.mrf.mxu0
  %v233 = vadd.f32 0.0, %v232
  %v234 = vpop.f32.mrf.mxu0
  %v235 = vadd.f32 0.0, %v234
  %236 = vmatmul.bf16.gmra.mxu0 %v119
  %v237 = vpop.f32.mrf.mxu0
  %v238 = vadd.f32 0.0, %v237
  %v239 = vpop.f32.mrf.mxu0
  %v240 = vadd.f32 0.0, %v239
  %241 = vmatmul.bf16.gmra.mxu0 %v120
  %v242 = vpop.f32.mrf.mxu0
  %v243 = vadd.f32 0.0, %v242
  %v244 = vpop.f32.mrf.mxu0
  %v245 = vadd.f32 0.0, %v244
  %246 = vmatmul.bf16.gmra.mxu0 %v121
  %v247 = vpop.f32.mrf.mxu0
  %v248 = vadd.f32 0.0, %v247
  %v249 = vpop.f32.mrf.mxu0
  %v250 = vadd.f32 0.0, %v249
  %251 = vmatmul.bf16.gmra.mxu0 %v122
  %v252 = vpop.f32.mrf.mxu0
  %v253 = vadd.f32 0.0, %v252
  %v254 = vpop.f32.mrf.mxu0
  %v255 = vadd.f32 0.0, %v254
  %256 = vdwg.mxu0
  %v257 = vadd.f32 %v124, %v218
  %v258 = vadd.f32 %v125, %v220
  %v259 = vadd.f32 %v126, %v223
  %v260 = vadd.f32 %v127, %v225
  %v261 = vadd.f32 %v128, %v228
  %v262 = vadd.f32 %v129, %v230
  %v263 = vadd.f32 %v130, %v233
  %v264 = vadd.f32 %v131, %v235
  %v265 = vadd.f32 %v132, %v238
  %v266 = vadd.f32 %v133, %v240
  %v267 = vadd.f32 %v134, %v243
  %v268 = vadd.f32 %v135, %v245
  %v269 = vadd.f32 %v136, %v248
  %v270 = vadd.f32 %v137, %v250
  %v271 = vadd.f32 %v138, %v253
  %v272 = vadd.f32 %v139, %v255
  %vm273 = vcmask 261120
  %274 = vst.msk [vmem:[%s3] sm:$0xff] %vm273, %v257
  %275 = vst.msk [vmem:[%s3 + $0x8] sm:$0xff] %vm273, %v258
  %276 = vst.msk [vmem:[%s3 + $0x10] sm:$0xff] %vm273, %v259
  %277 = vst.msk [vmem:[%s3 + $0x18] sm:$0xff] %vm273, %v260
  %278 = vst.msk [vmem:[%s3 + $0x20] sm:$0xff] %vm273, %v261
  %279 = vst.msk [vmem:[%s3 + $0x28] sm:$0xff] %vm273, %v262
  %280 = vst.msk [vmem:[%s3 + $0x30] sm:$0xff] %vm273, %v263
  %281 = vst.msk [vmem:[%s3 + $0x38] sm:$0xff] %vm273, %v264
  %282 = vst.msk [vmem:[%s3 + $0x40] sm:$0xff] %vm273, %v265
  %283 = vst.msk [vmem:[%s3 + $0x48] sm:$0xff] %vm273, %v266
  %284 = vst.msk [vmem:[%s3 + $0x50] sm:$0xff] %vm273, %v267
  %285 = vst.msk [vmem:[%s3 + $0x58] sm:$0xff] %vm273, %v268
  %286 = vst.msk [vmem:[%s3 + $0x60] sm:$0xff] %vm273, %v269
  %287 = vst.msk [vmem:[%s3 + $0x68] sm:$0xff] %vm273, %v270
  %288 = vst.msk [vmem:[%s3 + $0x70] sm:$0xff] %vm273, %v271
  %289 = vst.msk [vmem:[%s3 + $0x78] sm:$0xff] %vm273, %v272
  // Predicated region
  $region18: #{gmf_forward.2} parent=0 // pred_check
    _
  $region19: #{gmf_forward.2} parent=0 // pred_check_branch
    %291 = sbr.rel (0) target = $region21
  $region20: #{gmf_forward.2} parent=0 // pred_region
    _
  $region21: #{gmf_forward.2} parent=0 // pred_fallthru
    _
  // Predicated region
  $region22: #{gmf_forward.2} parent=0 // pred_check
    _
  $region23: #{gmf_forward.2} parent=0 // pred_check_branch
    %293 = sbr.rel (0) target = $region25
  $region24: #{gmf_forward.2} parent=0 // pred_region
    _
  $region25: #{gmf_forward.2} parent=0 // pred_fallthru
    _

// kernel: gmf_forward.3
$region0: #{gmf_forward.3}
  #allocation0 [shape = 'u32[]', space=smem, size = 0x4, offset = 0x4, fixed_abs, tag = 'smem constant byte address 0x4 - core index']
  #allocation1 [shape = 'u32[72,128]{1,0:T(1,128)}', space=vmem, size = 0x9000, scoped, tag = 'internal scratch']
  #allocation2 [shape = 'f32[128,32]{1,0:T(8,128)}', space=vmem, size = 0x10000, scoped, tag = 'scratch operand']
  #allocation3 [shape = 'f32[128,32]{1,0:T(8,128)}', space=vmem, size = 0x10000, scoped, tag = 'scratch operand']
  #allocation4 [shape = 's32[1]{0}', space=sflag, size = 0x4, scoped, tag = 'scoped memory for gmf_forward.3']
  #allocation5 [shape = 'u8[512]{0}', space=smem, size = 0x200, scoped, tag = 'prefetched SMEM operand 0']
  #allocation6 [shape = 'u8[512]{0}', space=smem, size = 0x200, scoped, tag = 'prefetched SMEM operand 1']
  %s0 = inlined_call_operand.vmem [shape: s32[128], index: 0, kind: input, shape index: {}]
  %s1 = inlined_call_operand.vmem [shape: s32[128], index: 1, kind: input, shape index: {}]
  %s2 = inlined_call_operand.vmem [shape: f32[128,32], index: 2, kind: input, shape index: {}]
  %s3 = inlined_call_operand.vmem [shape: f32[1,128], index: 3, kind: input, shape index: {}]
  %s4 = inlined_call_operand.vmem [shape: f32[1,128], index: 4, kind: output, shape index: {0}]
  %s5 = inlined_call_operand.hbm [shape: f32[1,1], index: 5, kind: output, shape index: {1}]
  %s6 = inlined_call_operand.hbm [shape: f32[1,1], index: 6, kind: output, shape index: {2}]
  %7 = xla_tuple %s4, %s5, %s6
  %s8 = sld [smem:[#allocation0]]
  $region49: #{gmf_forward.3} parent=0
    _
  %s10 = ssub.s32 1, %s8
  %s11 = scalar_select 0, %s10, %s8
  %s13 = sshll.u32 %s0, 4
  %s14 = int_to_ptr.vmem [resolvable:$true] %s13
  %16 = dma.vmem_to_smem %s14, 16, [#allocation5], [#allocation4]
  %s18 = sshll.u32 %s1, 4
  %s19 = int_to_ptr.vmem [resolvable:$true] %s18
  %21 = dma.vmem_to_smem %s19, 16, [#allocation6], [#allocation4]
  %23 = dma.done [#allocation4], 32
  %24 = sfence
  $region1: #{gmf_forward.3} parent=0
    #allocation7 [shape = 'u8[512]{0}', space=vmem, size = 0x400, scoped, tag = 'output window, operand 1, single buffered']
    #allocation8 [shape = 's32[1]{0}', space=sflag, size = 0x4, scoped, tag = 'scoped memory for gmf_forward.3']
    #allocation9 [shape = 'u8[512]{0}', space=vmem, size = 0x400, scoped, tag = 'output window, operand 2, single buffered']
    #allocation10 [shape = 's32[1]{0}', space=sflag, size = 0x4, scoped, tag = 'scoped memory for gmf_forward.3']
    %25 = vsyncpa [#allocation8], 0
    %26 = vsyncpa [#allocation10], 0
    // Predicated region
    $region2: #{gmf_forward.3} parent=1 // pred_check
      _
    $region3: #{gmf_forward.3} parent=1 // pred_check_branch
      %28 = sbr.rel (0) target = $region5
    $region4: #{gmf_forward.3} parent=1 // pred_region
      _
    $region5: #{gmf_forward.3} parent=1 // pred_fallthru
      _
    // Predicated region
    $region6: #{gmf_forward.3} parent=1 // pred_check
      _
    $region7: #{gmf_forward.3} parent=1 // pred_check_branch
      %30 = sbr.rel (0) target = $region9
    $region8: #{gmf_forward.3} parent=1 // pred_region
      _
    $region9: #{gmf_forward.3} parent=1 // pred_fallthru
      _
    %s31 = smul.u32 0, 128
    %p32 = scmp.eq.s32.totalorder 0, 0
    // Predicated region
    $region10: #{gmf_forward.3} parent=1 // pred_check
      %p33 = pneg %p32
    $region11: #{gmf_forward.3} parent=1 // pred_check_branch
      %35 = sbr.rel (%p33) target = $region13
    $region12: #{gmf_forward.3} parent=1 // pred_region
      %vm36 = vcmask 0
      %37 = vst.msk [vmem:[#allocation7] sm:$0x1] %vm36, 0.0
      %38 = vst.msk [vmem:[#allocation9] sm:$0x1] %vm36, 0.0
    $region13: #{gmf_forward.3} parent=1 // pred_fallthru
      _
    loop: start=0, step=1, limit=128
    $region14: #{gmf_forward.3} parent=1 // loop_pre_header
      _
    $region15: #{gmf_forward.3} parent=1 // loop_header
      %s40 = sphi 0, %s44
      %p41 = scmp.ge.s32.totalorder %s40, 128
    $region16: #{gmf_forward.3} parent=1 // loop_header_branch
      %43 = sbr.rel (%p41) target = $region20
    $region17: #{gmf_forward.3} parent=1 // loop_body
      %s45 = sadd.s32 %s31, %s40
      %s46 = sld [smem:[#allocation5 + %s45]]
      %s47 = scalar_lea.vmem %s2, %s46
      %v48 = vld [vmem:[%s47] sm:$0x1]
      %s49 = scalar_lea.vmem [#allocation2], %s40
      %vm50 = vcmask 253952
      %51 = vst.msk [vmem:[%s49] sm:$0x1] %vm50, %v48
      %s52 = sld [smem:[#allocation6 + %s45]]
      %s53 = scalar_lea.vmem %s2, %s52
      %v54 = vld [vmem:[%s53] sm:$0x1]
      %s55 = scalar_lea.vmem [#allocation3], %s40
      %56 = vst.msk [vmem:[%s55] sm:$0x1] %vm50, %v54
    $region18: #{gmf_forward.3} parent=1 // loop_footer
      %s44 = sadd.s32 1, %s40
    $region19: #{gmf_forward.3} parent=1 // loop_footer_branch
      %39 = sbr.rel target = $region15
    $region20: #{gmf_forward.3} parent=1 // loop_exit
      _
    %v57 = vld [vmem:[#allocation2] sm:$0xff]
    %v58 = vld [vmem:[#allocation2 + $0x8] sm:$0xff]
    %v59 = vld [vmem:[#allocation2 + $0x10] sm:$0xff]
    %v60 = vld [vmem:[#allocation2 + $0x18] sm:$0xff]
    %v61 = vld [vmem:[#allocation2 + $0x20] sm:$0xff]
    %v62 = vld [vmem:[#allocation2 + $0x28] sm:$0xff]
    %v63 = vld [vmem:[#allocation2 + $0x30] sm:$0xff]
    %v64 = vld [vmem:[#allocation2 + $0x38] sm:$0xff]
    %v65 = vld [vmem:[#allocation2 + $0x40] sm:$0xff]
    %v66 = vld [vmem:[#allocation2 + $0x48] sm:$0xff]
    %v67 = vld [vmem:[#allocation2 + $0x50] sm:$0xff]
    %v68 = vld [vmem:[#allocation2 + $0x58] sm:$0xff]
    %v69 = vld [vmem:[#allocation2 + $0x60] sm:$0xff]
    %v70 = vld [vmem:[#allocation2 + $0x68] sm:$0xff]
    %v71 = vld [vmem:[#allocation2 + $0x70] sm:$0xff]
    %v72 = vld [vmem:[#allocation2 + $0x78] sm:$0xff]
    %v73 = vld [vmem:[#allocation3] sm:$0xff]
    %v74 = vld [vmem:[#allocation3 + $0x8] sm:$0xff]
    %v75 = vld [vmem:[#allocation3 + $0x10] sm:$0xff]
    %v76 = vld [vmem:[#allocation3 + $0x18] sm:$0xff]
    %v77 = vld [vmem:[#allocation3 + $0x20] sm:$0xff]
    %v78 = vld [vmem:[#allocation3 + $0x28] sm:$0xff]
    %v79 = vld [vmem:[#allocation3 + $0x30] sm:$0xff]
    %v80 = vld [vmem:[#allocation3 + $0x38] sm:$0xff]
    %v81 = vld [vmem:[#allocation3 + $0x40] sm:$0xff]
    %v82 = vld [vmem:[#allocation3 + $0x48] sm:$0xff]
    %v83 = vld [vmem:[#allocation3 + $0x50] sm:$0xff]
    %v84 = vld [vmem:[#allocation3 + $0x58] sm:$0xff]
    %v85 = vld [vmem:[#allocation3 + $0x60] sm:$0xff]
    %v86 = vld [vmem:[#allocation3 + $0x68] sm:$0xff]
    %v87 = vld [vmem:[#allocation3 + $0x70] sm:$0xff]
    %v88 = vld [vmem:[#allocation3 + $0x78] sm:$0xff]
    %v89 = vmul.f32 %v57, %v73
    %v90 = vmul.f32 %v58, %v74
    %v91 = vmul.f32 %v59, %v75
    %v92 = vmul.f32 %v60, %v76
    %v93 = vmul.f32 %v61, %v77
    %v94 = vmul.f32 %v62, %v78
    %v95 = vmul.f32 %v63, %v79
    %v96 = vmul.f32 %v64, %v80
    %v97 = vmul.f32 %v65, %v81
    %v98 = vmul.f32 %v66, %v82
    %v99 = vmul.f32 %v67, %v83
    %v100 = vmul.f32 %v68, %v84
    %v101 = vmul.f32 %v69, %v85
    %v102 = vmul.f32 %v70, %v86
    %v103 = vmul.f32 %v71, %v87
    %v104 = vmul.f32 %v72, %v88
    %105 = vxpose.xlu0.b32.start [1/16] %v89, 128
    %106 = vxpose.xlu0.b32.cont [2/16] %v90, 128
    %107 = vxpose.xlu0.b32.cont [3/16] %v91, 128
    %108 = vxpose.xlu0.b32.cont [4/16] %v92, 128
    %109 = vxpose.xlu0.b32.cont [5/16] %v93, 128
    %110 = vxpose.xlu0.b32.cont [6/16] %v94, 128
    %111 = vxpose.xlu0.b32.cont [7/16] %v95, 128
    %112 = vxpose.xlu0.b32.cont [8/16] %v96, 128
    %113 = vxpose.xlu0.b32.cont [9/16] %v97, 128
    %114 = vxpose.xlu0.b32.cont [10/16] %v98, 128
    %115 = vxpose.xlu0.b32.cont [11/16] %v99, 128
    %116 = vxpose.xlu0.b32.cont [12/16] %v100, 128
    %117 = vxpose.xlu0.b32.cont [13/16] %v101, 128
    %118 = vxpose.xlu0.b32.cont [14/16] %v102, 128
    %119 = vxpose.xlu0.b32.cont [15/16] %v103, 128
    %120 = vxpose.xlu0.b32.end [16/16] %v104, 128
    %v121 = vpop.trf.xlu0
    %v122 = vpop.trf.xlu0
    %v123 = vpop.trf.xlu0
    %v124 = vpop.trf.xlu0
    %v125 = vpop.trf.xlu0
    %v126 = vpop.trf.xlu0
    %v127 = vpop.trf.xlu0
    %v128 = vpop.trf.xlu0
    %v129 = vpop.trf.xlu0
    %v130 = vpop.trf.xlu0
    %v131 = vpop.trf.xlu0
    %v132 = vpop.trf.xlu0
    %v133 = vpop.trf.xlu0
    %v134 = vpop.trf.xlu0
    %v135 = vpop.trf.xlu0
    %v136 = vpop.trf.xlu0
    %v137 = vadd.f32 %v121, %v122
    %v138 = vadd.f32 %v137, %v123
    %v139 = vadd.f32 %v138, %v124
    %v140 = vrot.slane %v139, 4
    %v141 = vadd.f32 %v139, %v140
    %v142 = vrot.slane %v141, 2
    %v143 = vadd.f32 %v141, %v142
    %v144 = vrot.slane %v143, 1
    %v145 = vadd.f32 %v143, %v144
    %v146 = vld [vmem:[%s3] sm:$0x1]
    %v147 = vadd.f32 %v145, %v146
    %148 = vst [vmem:[%s4] sm:$0x1] %v147
    %v149 = vlaneseq
    %v150 = vshrl.u32 %v149, 7
    %v151 = vadd.s32 %v150, 8
    %v152 = vadd.s32 %v150, 16
    %v153 = vadd.s32 %v150, 24
    %v154 = vadd.s32 %v150, 32
    %v155 = vadd.s32 %v150, 40
    %v156 = vadd.s32 %v150, 48
    %v157 = vadd.s32 %v150, 56
    %v158 = vadd.s32 %v150, 64
    %v159 = vadd.s32 %v150, 72
    %v160 = vadd.s32 %v150, 80
    %v161 = vadd.s32 %v150, 88
    %v162 = vadd.s32 %v150, 96
    %v163 = vadd.s32 %v150, 104
    %v164 = vadd.s32 %v150, 112
    %v165 = vadd.s32 %v150, 120
    %v166 = vstv %s31
    %v167 = vadd.s32 %v166, %v150
    %v168 = vadd.s32 %v166, %v151
    %v169 = vadd.s32 %v166, %v152
    %v170 = vadd.s32 %v166, %v153
    %v171 = vadd.s32 %v166, %v154
    %v172 = vadd.s32 %v166, %v155
    %v173 = vadd.s32 %v166, %v156
    %v174 = vadd.s32 %v166, %v157
    %v175 = vadd.s32 %v166, %v158
    %v176 = vadd.s32 %v166, %v159
    %v177 = vadd.s32 %v166, %v160
    %v178 = vadd.s32 %v166, %v161
    %v179 = vadd.s32 %v166, %v162
    %v180 = vadd.s32 %v166, %v163
    %v181 = vadd.s32 %v166, %v164
    %v182 = vadd.s32 %v166, %v165
    %vm183 = vcmp.lt.s32.totalorder %v167, 8
    %vm184 = vcmp.lt.s32.totalorder %v168, 8
    %vm185 = vcmp.lt.s32.totalorder %v169, 8
    %vm186 = vcmp.lt.s32.totalorder %v170, 8
    %vm187 = vcmp.lt.s32.totalorder %v171, 8
    %vm188 = vcmp.lt.s32.totalorder %v172, 8
    %vm189 = vcmp.lt.s32.totalorder %v173, 8
    %vm190 = vcmp.lt.s32.totalorder %v174, 8
    %vm191 = vcmp.lt.s32.totalorder %v175, 8
    %vm192 = vcmp.lt.s32.totalorder %v176, 8
    %vm193 = vcmp.lt.s32.totalorder %v177, 8
    %vm194 = vcmp.lt.s32.totalorder %v178, 8
    %vm195 = vcmp.lt.s32.totalorder %v179, 8
    %vm196 = vcmp.lt.s32.totalorder %v180, 8
    %vm197 = vcmp.lt.s32.totalorder %v181, 8
    %vm198 = vcmp.lt.s32.totalorder %v182, 8
    %v199 = vsel %vm183, 1, 0
    %v200 = vsel %vm184, 1, 0
    %v201 = vsel %vm185, 1, 0
    %v202 = vsel %vm186, 1, 0
    %v203 = vsel %vm187, 1, 0
    %v204 = vsel %vm188, 1, 0
    %v205 = vsel %vm189, 1, 0
    %v206 = vsel %vm190, 1, 0
    %v207 = vsel %vm191, 1, 0
    %v208 = vsel %vm192, 1, 0
    %v209 = vsel %vm193, 1, 0
    %v210 = vsel %vm194, 1, 0
    %v211 = vsel %vm195, 1, 0
    %v212 = vsel %vm196, 1, 0
    %v213 = vsel %vm197, 1, 0
    %v214 = vsel %vm198, 1, 0
    %v215 = vcvt.s32.f32 %v199
    %v216 = vcvt.s32.f32 %v200
    %v217 = vcvt.s32.f32 %v201
    %v218 = vcvt.s32.f32 %v202
    %v219 = vcvt.s32.f32 %v203
    %v220 = vcvt.s32.f32 %v204
    %v221 = vcvt.s32.f32 %v205
    %v222 = vcvt.s32.f32 %v206
    %v223 = vcvt.s32.f32 %v207
    %v224 = vcvt.s32.f32 %v208
    %v225 = vcvt.s32.f32 %v209
    %v226 = vcvt.s32.f32 %v210
    %v227 = vcvt.s32.f32 %v211
    %v228 = vcvt.s32.f32 %v212
    %v229 = vcvt.s32.f32 %v213
    %v230 = vcvt.s32.f32 %v214
    %v231 = vld [vmem:[#allocation7] sm:$0x1]
    %v232 = vmul.f32 %v215, %v57
    %v233 = vmul.f32 %v216, %v58
    %v234 = vmul.f32 %v217, %v59
    %v235 = vmul.f32 %v218, %v60
    %v236 = vmul.f32 %v219, %v61
    %v237 = vmul.f32 %v220, %v62
    %v238 = vmul.f32 %v221, %v63
    %v239 = vmul.f32 %v222, %v64
    %v240 = vmul.f32 %v223, %v65
    %v241 = vmul.f32 %v224, %v66
    %v242 = vmul.f32 %v225, %v67
    %v243 = vmul.f32 %v226, %v68
    %v244 = vmul.f32 %v227, %v69
    %v245 = vmul.f32 %v228, %v70
    %v246 = vmul.f32 %v229, %v71
    %v247 = vmul.f32 %v230, %v72
    %v248 = vmul.f32 %v232, %v57
    %v249 = vmul.f32 %v233, %v58
    %v250 = vmul.f32 %v234, %v59
    %v251 = vmul.f32 %v235, %v60
    %v252 = vmul.f32 %v236, %v61
    %v253 = vmul.f32 %v237, %v62
    %v254 = vmul.f32 %v238, %v63
    %v255 = vmul.f32 %v239, %v64
    %v256 = vmul.f32 %v240, %v65
    %v257 = vmul.f32 %v241, %v66
    %v258 = vmul.f32 %v242, %v67
    %v259 = vmul.f32 %v243, %v68
    %v260 = vmul.f32 %v244, %v69
    %v261 = vmul.f32 %v245, %v70
    %v262 = vmul.f32 %v246, %v71
    %v263 = vmul.f32 %v247, %v72
    %vm264 = vcmask 261120
    %v265 = vsel %vm264, %v248, 0.0
    %v266 = vsel %vm264, %v249, 0.0
    %v267 = vadd.f32 %v265, %v266
    %v268 = vsel %vm264, %v250, 0.0
    %v269 = vadd.f32 %v267, %v268
    %v270 = vsel %vm264, %v251, 0.0
    %v271 = vadd.f32 %v269, %v270
    %v272 = vsel %vm264, %v252, 0.0
    %v273 = vadd.f32 %v271, %v272
    %v274 = vsel %vm264, %v253, 0.0
    %v275 = vadd.f32 %v273, %v274
    %v276 = vsel %vm264, %v254, 0.0
    %v277 = vadd.f32 %v275, %v276
    %v278 = vsel %vm264, %v255, 0.0
    %v279 = vadd.f32 %v277, %v278
    %v280 = vsel %vm264, %v256, 0.0
    %v281 = vadd.f32 %v279, %v280
    %v282 = vsel %vm264, %v257, 0.0
    %v283 = vadd.f32 %v281, %v282
    %v284 = vsel %vm264, %v258, 0.0
    %v285 = vadd.f32 %v283, %v284
    %v286 = vsel %vm264, %v259, 0.0
    %v287 = vadd.f32 %v285, %v286
    %v288 = vsel %vm264, %v260, 0.0
    %v289 = vadd.f32 %v287, %v288
    %v290 = vsel %vm264, %v261, 0.0
    %v291 = vadd.f32 %v289, %v290
    %v292 = vsel %vm264, %v262, 0.0
    %v293 = vadd.f32 %v291, %v292
    %v294 = vsel %vm264, %v263, 0.0
    %v295 = vadd.f32 %v293, %v294
    %296 = vadd.xlane.f32.xlu0 %v295
    %v297 = vpop.xlane.xlu0 %296
    %v298 = vrot.slane %v297, 4
    %v299 = vadd.f32 %v297, %v298
    %v300 = vrot.slane %v299, 2
    %v301 = vadd.f32 %v299, %v300
    %v302 = vrot.slane %v301, 1
    %v303 = vadd.f32 %v301, %v302
    %s304 = vtos %v303
    %v305 = vstv %s304
    %v306 = vadd.f32 %v231, %v305
    %vm307 = vcmask 0
    %308 = vst.msk [vmem:[#allocation7] sm:$0x1] %vm307, %v306
    %v309 = vld [vmem:[#allocation9] sm:$0x1]
    %v310 = vmul.f32 %v215, %v73
    %v311 = vmul.f32 %v216, %v74
    %v312 = vmul.f32 %v217, %v75
    %v313 = vmul.f32 %v218, %v76
    %v314 = vmul.f32 %v219, %v77
    %v315 = vmul.f32 %v220, %v78
    %v316 = vmul.f32 %v221, %v79
    %v317 = vmul.f32 %v222, %v80
    %v318 = vmul.f32 %v223, %v81
    %v319 = vmul.f32 %v224, %v82
    %v320 = vmul.f32 %v225, %v83
    %v321 = vmul.f32 %v226, %v84
    %v322 = vmul.f32 %v227, %v85
    %v323 = vmul.f32 %v228, %v86
    %v324 = vmul.f32 %v229, %v87
    %v325 = vmul.f32 %v230, %v88
    %v326 = vmul.f32 %v310, %v73
    %v327 = vmul.f32 %v311, %v74
    %v328 = vmul.f32 %v312, %v75
    %v329 = vmul.f32 %v313, %v76
    %v330 = vmul.f32 %v314, %v77
    %v331 = vmul.f32 %v315, %v78
    %v332 = vmul.f32 %v316, %v79
    %v333 = vmul.f32 %v317, %v80
    %v334 = vmul.f32 %v318, %v81
    %v335 = vmul.f32 %v319, %v82
    %v336 = vmul.f32 %v320, %v83
    %v337 = vmul.f32 %v321, %v84
    %v338 = vmul.f32 %v322, %v85
    %v339 = vmul.f32 %v323, %v86
    %v340 = vmul.f32 %v324, %v87
    %v341 = vmul.f32 %v325, %v88
    %v342 = vsel %vm264, %v326, 0.0
    %v343 = vsel %vm264, %v327, 0.0
    %v344 = vadd.f32 %v342, %v343
    %v345 = vsel %vm264, %v328, 0.0
    %v346 = vadd.f32 %v344, %v345
    %v347 = vsel %vm264, %v329, 0.0
    %v348 = vadd.f32 %v346, %v347
    %v349 = vsel %vm264, %v330, 0.0
    %v350 = vadd.f32 %v348, %v349
    %v351 = vsel %vm264, %v331, 0.0
    %v352 = vadd.f32 %v350, %v351
    %v353 = vsel %vm264, %v332, 0.0
    %v354 = vadd.f32 %v352, %v353
    %v355 = vsel %vm264, %v333, 0.0
    %v356 = vadd.f32 %v354, %v355
    %v357 = vsel %vm264, %v334, 0.0
    %v358 = vadd.f32 %v356, %v357
    %v359 = vsel %vm264, %v335, 0.0
    %v360 = vadd.f32 %v358, %v359
    %v361 = vsel %vm264, %v336, 0.0
    %v362 = vadd.f32 %v360, %v361
    %v363 = vsel %vm264, %v337, 0.0
    %v364 = vadd.f32 %v362, %v363
    %v365 = vsel %vm264, %v338, 0.0
    %v366 = vadd.f32 %v364, %v365
    %v367 = vsel %vm264, %v339, 0.0
    %v368 = vadd.f32 %v366, %v367
    %v369 = vsel %vm264, %v340, 0.0
    %v370 = vadd.f32 %v368, %v369
    %v371 = vsel %vm264, %v341, 0.0
    %v372 = vadd.f32 %v370, %v371
    %373 = vadd.xlane.f32.xlu0 %v372
    %v374 = vpop.xlane.xlu0 %373
    %v375 = vrot.slane %v374, 4
    %v376 = vadd.f32 %v374, %v375
    %v377 = vrot.slane %v376, 2
    %v378 = vadd.f32 %v376, %v377
    %v379 = vrot.slane %v378, 1
    %v380 = vadd.f32 %v378, %v379
    %s381 = vtos %v380
    %v382 = vstv %s381
    %v383 = vadd.f32 %v309, %v382
    %384 = vst.msk [vmem:[#allocation9] sm:$0x1] %vm307, %v383
    // Predicated region
    $region21: #{gmf_forward.3} parent=1 // pred_check
      %p385 = pneg %p32
    $region22: #{gmf_forward.3} parent=1 // pred_check_branch
      %387 = sbr.rel (%p385) target = $region24
    $region23: #{gmf_forward.3} parent=1 // pred_region
      %v388 = vld [vmem:[#allocation7] sm:$0x1]
      %v389 = vmul.f32 %v388, 0.00390625
      %390 = vst.msk [vmem:[#allocation7] sm:$0x1] %vm307, %v389
      %v391 = vld [vmem:[#allocation9] sm:$0x1]
      %v392 = vmul.f32 %v391, 0.00390625
      %393 = vst.msk [vmem:[#allocation9] sm:$0x1] %vm307, %v392
    $region24: #{gmf_forward.3} parent=1 // pred_fallthru
      _
    // Predicated region
    $region25: #{gmf_forward.3} parent=1 // pred_check
      _
    $region26: #{gmf_forward.3} parent=1 // pred_check_branch
      %395 = sbr.rel (0) target = $region28
    $region27: #{gmf_forward.3} parent=1 // pred_region
      _
    $region28: #{gmf_forward.3} parent=1 // pred_fallthru
      _
    // Predicated region
    $region29: #{gmf_forward.3} parent=1 // pred_check
      _
    $region30: #{gmf_forward.3} parent=1 // pred_check_branch
      %397 = sbr.rel (0) target = $region32
    $region31: #{gmf_forward.3} parent=1 // pred_region
      %399 = vsyncadd [#allocation8], 0
      %s401 = sshll.u32 [#allocation7], 4
      %s402 = int_to_ptr.vmem [resolvable:$true] %s401
      %s403 = sshll.u32 %s5, 4
      %s404 = int_to_ptr.hbm [resolvable:$true] %s403
      %406 = dma.vmem_to_hbm [thread:$0]  %s402, 16, %s404, [#allocation8]
    $region32: #{gmf_forward.3} parent=1 // pred_fallthru
      _
    // Predicated region
    $region33: #{gmf_forward.3} parent=1 // pred_check
      _
    $region34: #{gmf_forward.3} parent=1 // pred_check_branch
      %408 = sbr.rel (0) target = $region36
    $region35: #{gmf_forward.3} parent=1 // pred_region
      %410 = vsyncadd [#allocation10], 0
      %s412 = sshll.u32 [#allocation9], 4
      %s413 = int_to_ptr.vmem [resolvable:$true] %s412
      %s414 = sshll.u32 %s6, 4
      %s415 = int_to_ptr.hbm [resolvable:$true] %s414
      %417 = dma.vmem_to_hbm [thread:$0]  %s413, 16, %s415, [#allocation10]
    $region36: #{gmf_forward.3} parent=1 // pred_fallthru
      _
    // Predicated region
    $region37: #{gmf_forward.3} parent=1 // pred_check
      _
    $region38: #{gmf_forward.3} parent=1 // pred_check_branch
      %419 = sbr.rel (0) target = $region40
    $region39: #{gmf_forward.3} parent=1 // pred_region
      _
    $region40: #{gmf_forward.3} parent=1 // pred_fallthru
      _
    // Predicated region
    $region41: #{gmf_forward.3} parent=1 // pred_check
      _
    $region42: #{gmf_forward.3} parent=1 // pred_check_branch
      %421 = sbr.rel (0) target = $region44
    $region43: #{gmf_forward.3} parent=1 // pred_region
      %423 = dma.done [#allocation8], 16
    $region44: #{gmf_forward.3} parent=1 // pred_fallthru
      _
    // Predicated region
    $region45: #{gmf_forward.3} parent=1 // pred_check
      _
    $region46: #{gmf_forward.3} parent=1 // pred_check_branch
      %425 = sbr.rel (0) target = $region48
    $region47: #{gmf_forward.3} parent=1 // pred_region
      %427 = dma.done [#allocation10], 16
    $region48: #{gmf_forward.3} parent=1 // pred_fallthru
      _
    %428 = vsyncpa [#allocation8], 1
    %429 = vsyncpa [#allocation10], 1

</llo_original>
